<compile_context>
chip_gen: v7x
topology: tpu7x:2x2x1
jax: 0.10.0
libtpu: 0.0.40
codegen_flags: <defaults>
</compile_context>

<pallas_src>
import math

import numpy as np
import jax
import jax.numpy as jnp
from jax.experimental import pallas as pl
from jax.experimental.pallas import tpu as pltpu


def _sinusoidal_kernel(x_ref, w_ref, off_ref, out_ref):
    # x_ref:   (TB, per_row) f32  -- per_row batch elements packed per output row
    # w_ref:   (per_row, W)  f32  -- W[j, l] = freq(l % dim) if l // dim == j else 0
    # off_ref: (1, W)        f32  -- 0 on sin lanes, pi/2 on cos lanes
    # out_ref: (TB, W)            -- lane-dense output slab
    x = x_ref[...]
    w = w_ref[...]
    per_row = w.shape[0]
    # Exactly one nonzero term per lane => exact f32 arithmetic on the VPU.
    phase = x[:, 0:1] * w[0:1, :]
    for j in range(1, per_row):
        phase = phase + x[:, j:j + 1] * w[j:j + 1, :]
    phase = phase + off_ref[...]
    out_ref[...] = jnp.sin(phase).astype(out_ref.dtype)


def sinusoidal_pos_emb(x, dim, *, out_dtype=jnp.float32, block_bytes=1 << 20):
    """x: (B,) timesteps -> (B, dim) = concat(sin(x*freqs), cos(x*freqs), -1)."""
    if dim % 2 != 0:
        raise ValueError("dim must be even")
    if dim < 4:
        raise ValueError("dim must be >= 4 (dim == 2 divides by zero, as in the reference)")
    b = x.shape[0]
    half = dim // 2

    # Frequency table, computed exactly as the PyTorch reference does (f32).
    emb = math.log(10000.0) / (half - 1)
    freqs = jnp.exp(jnp.arange(half, dtype=jnp.float32) * -emb)           # (half,)
    freq_full = jnp.concatenate([freqs, freqs])                           # (dim,)
    off_full = jnp.concatenate(
        [jnp.zeros((half,), jnp.float32),
         jnp.full((half,), math.pi / 2.0, jnp.float32)])                  # (dim,)

    # Lane-dense packing: fold 128 // dim consecutive batch elements into each
    # 128-lane output row when that tiles evenly; otherwise fall back to (B, dim).
    if dim < 128 and 128 % dim == 0 and b % (128 // dim) == 0:
        per_row = 128 // dim
    else:
        per_row = 1
    width = per_row * dim
    rows = b // per_row

    # Constant tables: expansion-weights and phase offsets over the packed row.
    lane = np.arange(width)
    sel = (lane[None, :] // dim) == np.arange(per_row)[:, None]           # (per_row, width)
    w_tab = jnp.where(jnp.asarray(sel), jnp.tile(freq_full, per_row)[None, :], 0.0)
    w_tab = w_tab.astype(jnp.float32)                                     # (per_row, width)
    off_tab = jnp.tile(off_full, per_row)[None, :]                        # (1, width)

    x_in = x.astype(jnp.float32).reshape(rows, per_row)                   # metadata reshape

    # Row-tile size: ~block_bytes output block (double-buffered by the pipeline),
    # budgeted against v7x's smaller VMEM; multiple of 16 sublanes (f32 or bf16).
    itemsize = jnp.dtype(out_dtype).itemsize
    tb_cap = max(16, (block_bytes // (width * itemsize)) // 16 * 16)
    tb = rows if rows <= tb_cap else tb_cap
    grid = (pl.cdiv(rows, tb),)

    out_flat = pl.pallas_call(
        _sinusoidal_kernel,
        out_shape=jax.ShapeDtypeStruct((rows, width), out_dtype),
        grid_spec=pltpu.PrefetchScalarGridSpec(
            num_scalar_prefetch=0,
            grid=grid,
            in_specs=[
                pl.BlockSpec((tb, per_row), lambda i: (i, 0)),
                pl.BlockSpec((per_row, width), lambda i: (0, 0)),   # resident constants
                pl.BlockSpec((1, width), lambda i: (0, 0)),         # resident constants
            ],
            out_specs=pl.BlockSpec((tb, width), lambda i: (i, 0)),
        ),
        compiler_params=pltpu.CompilerParams(
            dimension_semantics=("parallel",),      # shard row tiles across TCs (v7x)
            vmem_limit_bytes=32 * 1024 * 1024,
        ),
    )(x_in, w_tab, off_tab)

    return out_flat.reshape(b, dim)                                       # metadata reshape


def _reference(x, dim):
    half_dim = dim // 2
    emb = math.log(10000.0) / (half_dim - 1)
    emb = jnp.exp(jnp.arange(half_dim, dtype=jnp.float32) * -emb)
    emb = x[:, None].astype(jnp.float32) * emb[None, :]
    return jnp.concatenate([jnp.sin(emb), jnp.cos(emb)], axis=-1)


if __name__ == "__main__":
    key = jax.random.PRNGKey(0)

    # cos is evaluated as sin(t + pi/2); for t up to ~1000 the f32 rounding of the
    # phase addition bounds the deviation from cos(t) by ~4e-5, hence atol=2e-4.
    TOL = 2e-4

    # 1) Tiny case matching the module's typical use (B=8, dim=32): lane-dense
    #    path, 4 batch elements packed per 128-lane output row.
    batch, dim = 8, 32
    x = jax.random.uniform(key, (batch,), jnp.float32, minval=0.0, maxval=1000.0)
    out = jax.block_until_ready(sinusoidal_pos_emb(x, dim))
    assert out.shape == (batch, dim)
    assert jnp.allclose(out, _reference(x, dim), atol=TOL), "mismatch (tiny case)"

    # 2) Larger batch exercising the row-tiled grid (grid > 1, "parallel" axis).
    batch2 = 16384
    x2 = jax.random.uniform(jax.random.PRNGKey(1), (batch2,), jnp.float32,
                            minval=0.0, maxval=1000.0)
    out2 = jax.block_until_ready(sinusoidal_pos_emb(x2, dim))
    assert out2.shape == (batch2, dim)
    assert jnp.allclose(out2, _reference(x2, dim), atol=TOL), "mismatch (tiled case)"

    print("KERNEL_OK")
</pallas_src>

<mosaic_0001>
module attributes {stable_mosaic.version = 11 : i64} {
  func.func @_sinusoidal_kernel(%arg0: i32, %arg1: memref<2x4xf32, #tpu.memory_space<vmem>>, %arg2: memref<4x128xf32, #tpu.memory_space<vmem>>, %arg3: memref<1x128xf32, #tpu.memory_space<vmem>>, %arg4: memref<2x128xf32, #tpu.memory_space<vmem>>) attributes {dimension_semantics = [#tpu.dimension_semantics<parallel>], iteration_bounds = array<i64: 1>, scalar_prefetch = 0 : i64, scratch_operands = 0 : i64, tpu.core_type = #tpu.core_type<tc>, window_params = [{transform_indices = @transform_0, window_bounds = array<i64: 2, 4>}, {pipeline_mode = #tpu.pipeline_mode<synchronous>, transform_indices = @transform_1, window_bounds = array<i64: 4, 128>}, {pipeline_mode = #tpu.pipeline_mode<synchronous>, transform_indices = @transform_2, window_bounds = array<i64: 1, 128>}, {transform_indices = @transform_3, window_bounds = array<i64: 2, 128>}]} {
    %c0 = arith.constant 0 : index
    %c0_0 = arith.constant 0 : index
    %0 = vector.load %arg1[%c0, %c0_0] : memref<2x4xf32, #tpu.memory_space<vmem>>, vector<2x4xf32>
    %c0_1 = arith.constant 0 : index
    %c0_2 = arith.constant 0 : index
    %1 = vector.load %arg2[%c0_1, %c0_2] : memref<4x128xf32, #tpu.memory_space<vmem>>, vector<4x128xf32>
    %2 = vector.extract_strided_slice %0 {offsets = [0, 0], sizes = [2, 1], strides = [1, 1]} : vector<2x4xf32> to vector<2x1xf32>
    %3 = vector.extract_strided_slice %1 {offsets = [0, 0], sizes = [1, 128], strides = [1, 1]} : vector<4x128xf32> to vector<1x128xf32>
    %4 = vector.broadcast %2 : vector<2x1xf32> to vector<2x128xf32>
    %5 = vector.broadcast %3 : vector<1x128xf32> to vector<2x128xf32>
    %6 = arith.mulf %4, %5 : vector<2x128xf32>
    %7 = vector.extract_strided_slice %0 {offsets = [0, 1], sizes = [2, 1], strides = [1, 1]} : vector<2x4xf32> to vector<2x1xf32>
    %8 = vector.extract_strided_slice %1 {offsets = [1, 0], sizes = [1, 128], strides = [1, 1]} : vector<4x128xf32> to vector<1x128xf32>
    %9 = vector.broadcast %7 : vector<2x1xf32> to vector<2x128xf32>
    %10 = vector.broadcast %8 : vector<1x128xf32> to vector<2x128xf32>
    %11 = arith.mulf %9, %10 : vector<2x128xf32>
    %12 = arith.addf %6, %11 : vector<2x128xf32>
    %13 = vector.extract_strided_slice %0 {offsets = [0, 2], sizes = [2, 1], strides = [1, 1]} : vector<2x4xf32> to vector<2x1xf32>
    %14 = vector.extract_strided_slice %1 {offsets = [2, 0], sizes = [1, 128], strides = [1, 1]} : vector<4x128xf32> to vector<1x128xf32>
    %15 = vector.broadcast %13 : vector<2x1xf32> to vector<2x128xf32>
    %16 = vector.broadcast %14 : vector<1x128xf32> to vector<2x128xf32>
    %17 = arith.mulf %15, %16 : vector<2x128xf32>
    %18 = arith.addf %12, %17 : vector<2x128xf32>
    %19 = vector.extract_strided_slice %0 {offsets = [0, 3], sizes = [2, 1], strides = [1, 1]} : vector<2x4xf32> to vector<2x1xf32>
    %20 = vector.extract_strided_slice %1 {offsets = [3, 0], sizes = [1, 128], strides = [1, 1]} : vector<4x128xf32> to vector<1x128xf32>
    %21 = vector.broadcast %19 : vector<2x1xf32> to vector<2x128xf32>
    %22 = vector.broadcast %20 : vector<1x128xf32> to vector<2x128xf32>
    %23 = arith.mulf %21, %22 : vector<2x128xf32>
    %24 = arith.addf %18, %23 : vector<2x128xf32>
    %c0_3 = arith.constant 0 : index
    %c0_4 = arith.constant 0 : index
    %25 = vector.load %arg3[%c0_3, %c0_4] : memref<1x128xf32, #tpu.memory_space<vmem>>, vector<1x128xf32>
    %26 = vector.broadcast %25 : vector<1x128xf32> to vector<2x128xf32>
    %27 = arith.addf %24, %26 : vector<2x128xf32>
    %28 = math.sin %27 : vector<2x128xf32>
    %c0_5 = arith.constant 0 : index
    %c0_6 = arith.constant 0 : index
    %29 = vector.load %arg4[%c0_5, %c0_6] : memref<2x128xf32, #tpu.memory_space<vmem>>, vector<2x128xf32>
    tpu.vector_store %arg4[%c0_5, %c0_6], %28 {strides = array<i32>} : memref<2x128xf32, #tpu.memory_space<vmem>>, vector<2x128xf32>,
    return
  }
  func.func @transform_0(%arg0: i32) -> (i32, i32) {
    %c0_i32 = arith.constant 0 : i32
    %c0_i32_0 = arith.constant 0 : i32
    return %arg0, %c0_i32 : i32, i32
  }
  func.func @transform_1(%arg0: i32) -> (i32, i32) {
    %c0_i32 = arith.constant 0 : i32
    %c0_i32_0 = arith.constant 0 : i32
    %c0_i32_1 = arith.constant 0 : i32
    return %c0_i32, %c0_i32_0 : i32, i32
  }
  func.func @transform_2(%arg0: i32) -> (i32, i32) {
    %c0_i32 = arith.constant 0 : i32
    %c0_i32_0 = arith.constant 0 : i32
    %c0_i32_1 = arith.constant 0 : i32
    return %c0_i32, %c0_i32_0 : i32, i32
  }
  func.func @transform_3(%arg0: i32) -> (i32, i32) {
    %c0_i32 = arith.constant 0 : i32
    %c0_i32_0 = arith.constant 0 : i32
    return %arg0, %c0_i32 : i32, i32
  }
}

</mosaic_0001>

<llo_original>
// kernel: tpu_custom_call.1
$region0: #{tpu_custom_call.1}
  #allocation0 [shape = 'u32[]', space=smem, size = 0x4, offset = 0x4, fixed_abs, tag = 'smem constant byte address 0x4 - core index']
  #allocation1 [shape = 'u32[144,128]{1,0:T(1,128)}', space=vmem, size = 0x12000, scoped, tag = 'internal scratch']
  %s0 = inlined_call_operand.hbm [shape: f32[2,4], index: 0, kind: input, shape index: {}]
  %s1 = inlined_call_operand.hbm [shape: f32[4,128], index: 1, kind: input, shape index: {}]
  %s2 = inlined_call_operand.vmem [shape: f32[1,128], index: 2, kind: input, shape index: {}]
  %s3 = inlined_call_operand.hbm [shape: f32[2,128], index: 3, kind: output, shape index: {}]
  %s4 = sld [smem:[#allocation0]]
  $region30: #{tpu_custom_call.1} parent=0
    _
  %s6 = ssub.s32 1, %s4
  %s7 = scalar_select 0, %s6, %s4
  $region1: #{tpu_custom_call.1} parent=0
    #allocation2 [shape = 'u8[1024]{0}', space=vmem, size = 0x400, scoped, tag = 'input window, operand 0, single buffered']
    #allocation3 [shape = 's32[1]{0}', space=sflag, size = 0x4, scoped, tag = 'scoped memory for tpu_custom_call.1']
    #allocation4 [shape = 's32[1]{0}', space=sflag, size = 0x4, scoped, tag = 'scoped memory for tpu_custom_call.1']
    #allocation5 [shape = 'u8[2048]{0}', space=vmem, size = 0x800, scoped, tag = 'input window, operand 1, single buffered']
    #allocation6 [shape = 's32[1]{0}', space=sflag, size = 0x4, scoped, tag = 'scoped memory for tpu_custom_call.1']
    #allocation7 [shape = 'u8[1024]{0}', space=vmem, size = 0x400, scoped, tag = 'output window, operand 0, single buffered']
    %8 = vsyncpa [#allocation3], 0
    %9 = vsyncpa [#allocation6], 0
    %10 = vsyncpa [#allocation4], 0
    // Predicated region
    $region2: #{tpu_custom_call.1} parent=1 // pred_check
      _
    $region3: #{tpu_custom_call.1} parent=1 // pred_check_branch
      %12 = sbr.rel (0) target = $region5
    $region4: #{tpu_custom_call.1} parent=1 // pred_region
      %s14 = ssub.s32 32, 32
      %15 = vsyncadd [#allocation3], %s14
      %s17 = sshll.u32 [#allocation2], 4
      %s18 = int_to_ptr.vmem [resolvable:$true] %s17
      %20 = dma.hbm_to_vmem [thread:$0]  %s0, 32, %s18, [#allocation3]
    $region5: #{tpu_custom_call.1} parent=1 // pred_fallthru
      _
    // Predicated region
    $region6: #{tpu_custom_call.1} parent=1 // pred_check
      _
    $region7: #{tpu_custom_call.1} parent=1 // pred_check_branch
      %22 = sbr.rel (0) target = $region9
    $region8: #{tpu_custom_call.1} parent=1 // pred_region
      %s24 = ssub.s32 64, 64
      %25 = vsyncadd [#allocation6], %s24
      %s27 = sshll.u32 [#allocation5], 4
      %s28 = int_to_ptr.vmem [resolvable:$true] %s27
      %30 = dma.hbm_to_vmem [thread:$0]  %s1, 64, %s28, [#allocation6]
    $region9: #{tpu_custom_call.1} parent=1 // pred_fallthru
      _
    // Predicated region
    $region10: #{tpu_custom_call.1} parent=1 // pred_check
      _
    $region11: #{tpu_custom_call.1} parent=1 // pred_check_branch
      %32 = sbr.rel (0) target = $region13
    $region12: #{tpu_custom_call.1} parent=1 // pred_region
      _
    $region13: #{tpu_custom_call.1} parent=1 // pred_fallthru
      _
    // Predicated region
    $region14: #{tpu_custom_call.1} parent=1 // pred_check
      _
    $region15: #{tpu_custom_call.1} parent=1 // pred_check_branch
      %34 = sbr.rel (0) target = $region17
    $region16: #{tpu_custom_call.1} parent=1 // pred_region
      %35 = dma.done [#allocation3], 32
    $region17: #{tpu_custom_call.1} parent=1 // pred_fallthru
      _
    // Predicated region
    $region18: #{tpu_custom_call.1} parent=1 // pred_check
      _
    $region19: #{tpu_custom_call.1} parent=1 // pred_check_branch
      %37 = sbr.rel (0) target = $region21
    $region20: #{tpu_custom_call.1} parent=1 // pred_region
      %38 = dma.done [#allocation6], 64
    $region21: #{tpu_custom_call.1} parent=1 // pred_fallthru
      _
    %v39 = vld [vmem:[#allocation2] sm:$0x3]
    %v40 = vld [vmem:[#allocation5] sm:$0xf]
    %42 = vset.pattern.permute.xlu0 0
    %43 = vperm.xlu0 %42, %v39
    %v44 = vpop.permute.xlu0 %43
    %v46 = vlaneseq
    %v47 = vshrl.u32 %v46, 7
    %v48 = vsub.s32 0, %v47
    %v49 = vrot.slane %v40, %v48
    %v50 = vmul.f32 %v44, %v49
    %51 = vset.pattern.permute.xlu0 1
    %52 = vperm.xlu0 %51, %v39
    %v53 = vpop.permute.xlu0 %52
    %v55 = vlaneseq
    %v56 = vshrl.u32 %v55, 7
    %v57 = vsub.s32 1, %v56
    %v58 = vrot.slane %v40, %v57
    %v59 = vmul.f32 %v53, %v58
    %v60 = vadd.f32 %v50, %v59
    %61 = vset.pattern.permute.xlu0 2
    %62 = vperm.xlu0 %61, %v39
    %v63 = vpop.permute.xlu0 %62
    %v65 = vlaneseq
    %v66 = vshrl.u32 %v65, 7
    %v67 = vsub.s32 2, %v66
    %v68 = vrot.slane %v40, %v67
    %v69 = vmul.f32 %v63, %v68
    %v70 = vadd.f32 %v60, %v69
    %71 = vset.pattern.permute.xlu0 3
    %72 = vperm.xlu0 %71, %v39
    %v73 = vpop.permute.xlu0 %72
    %v75 = vlaneseq
    %v76 = vshrl.u32 %v75, 7
    %v77 = vsub.s32 3, %v76
    %v78 = vrot.slane %v40, %v77
    %v79 = vmul.f32 %v73, %v78
    %v80 = vadd.f32 %v70, %v79
    %v81 = vld [vmem:[%s2] sm:$0x1]
    %v83 = vlaneseq
    %v84 = vshrl.u32 %v83, 7
    %v85 = vsub.s32 0, %v84
    %v86 = vrot.slane %v81, %v85
    %v88 = vadd.f32 %v80, %v86
    %v89 = vand.u32 2147483647, %v88
    %vm90 = vcmp.le.f32.partialorder %v89, 0.7853982
    %vm91 = vcmp.lt.s32.totalorder %v88, 0
    %v92 = vand.u32 %v88, 2139095040
    %v93 = vshrl.u32 %v92, 23
    %v94 = vsub.s32 %v93, 127
    %v95 = vand.u32 2147483647, %v88
    %v96 = vand.u32 %v95, 8388607
    %v97 = vor.u32 %v96, 8388608
    %v98 = vsub.s32 0, %v97
    %v99 = vadd.s32 %v94, 1
    %vm100 = vcmp.gt.s32.totalorder %v99, 0
    %v101 = vsel %vm100, %v99, 0
    %v102 = vshrl.u32 %v101, 5
    %v103 = vand.u32 %v101, 31
    %v104 = vsub.s32 32, %v103
    %v105 = vshrl.u32 683565275, %v104
    %v106 = vshll.u32 683565275, %v103
    %v107 = vshrl.u32 2475754826, %v104
    %v108 = vor.u32 %v106, %v107
    %v109 = vshll.u32 2475754826, %v103
    %v110 = vshrl.u32 2131351028, %v104
    %v111 = vor.u32 %v109, %v110
    %v112 = vshll.u32 2131351028, %v103
    %v113 = vshrl.u32 2102212464, %v104
    %v114 = vor.u32 %v112, %v113
    %v115 = vshll.u32 2102212464, %v103
    %v116 = vshrl.u32 920167782, %v104
    %v117 = vor.u32 %v115, %v116
    %v118 = vshll.u32 920167782, %v103
    %v119 = vshrl.u32 1326507024, %v104
    %v120 = vor.u32 %v118, %v119
    %vm121 = vcmp.lt.s32.totalorder %v102, 1
    %vm122 = vcmp.lt.s32.totalorder %v102, 2
    %vm123 = vcmp.lt.s32.totalorder %v102, 3
    %vm124 = vcmp.lt.s32.totalorder %v102, 4
    %v125 = vsel %vm121, %v105, %v108
    %v126 = vsel %vm124, %v114, 2102212464
    %v127 = vsel %vm123, %v111, %v126
    %v128 = vsel %vm122, %v125, %v127
    %v129 = vsel %vm121, %v108, %v111
    %v130 = vsel %vm124, %v117, 920167782
    %v131 = vsel %vm123, %v114, %v130
    %v132 = vsel %vm122, %v129, %v131
    %v133 = vsel %vm121, %v111, %v114
    %v134 = vsel %vm124, %v120, 1326507024
    %v135 = vsel %vm123, %v117, %v134
    %v136 = vsel %vm122, %v133, %v135
    %v137 = vshll.u32 %v97, 8
    %v138 = vmul.u32.u64.compose %v137, %v136
    %v139 = vextract.low.u32 %v138
    %v140 = vextract.high.u32 %v138
    %v141 = vmul.u32.u64.compose %v137, %v132
    %v142 = vextract.low.u32 %v141
    %v143 = vextract.high.u32 %v141
    %v144 = vmul.u32 %v137, %v128
    %v145 = vadd.s32 %v140, %v142
    %vm146 = vc.u32 %v140, %v142
    %v147 = vadd.s32 %v143, 1
    %v148 = vsel %vm146, %v147, %v143
    %v149 = vadd.s32 %v144, %v148
    %v150 = vadd.s32 %v149, 536870912
    %v151 = vshrl.u32 %v150, 30
    %v152 = vshll.u32 %v151, 30
    %v153 = vsub.s32 %v149, %v152
    %vm154 = vcmp.lt.s32.totalorder %v153, 0
    %v155 = vsub.s32 0, %v153
    %v156 = vsel %vm154, %v155, %v153
    %v157 = vclz %v156
    %v158 = vsub.s32 %v157, 2
    %vm159 = vcmp.gt.s32.totalorder 0, %v158
    %v160 = vsel %vm159, 0, %v158
    %v161 = vsub.s32 32, %v160
    %v162 = vshll.u32 %v153, %v160
    %v163 = vshrl.u32 %v145, %v161
    %v164 = vor.u32 %v162, %v163
    %v165 = vsub.s32 4294967266, %v160
    %v166 = vadd.s32 %v165, 127
    %v167 = vshll.u32 %v166, 23
    %v168 = vor.u32 4788187, %v167
    %v169 = vand.u32 2147483647, %v168
    %v171 = vcvt.s32.f32 %v164
    %v172 = vmul.f32 %v171, %v169
    %v173 = vxor.u32 %v172, 2147483648
    %v174 = vsel %vm91, %v173, %v172
    %v175 = vsub.s32 4, %v151
    %v176 = vsel %vm91, %v175, %v151
    %v177 = vsel %vm90, %v88, %v174
    %v178 = vsel %vm90, 0, %v176
    %v179 = vcosq.f32.pop %v177
    %v180 = vsinq.f32.pop %v177
    %vm181 = vweird.f32 %v88
    %v182 = vadd.s32 %v178, 3
    %v183 = vand.u32 %v182, 3
    %vm184 = vcmp.lt.s32.totalorder %v183, 2
    %vm185 = vcmp.eq.s32.totalorder %v183, 0
    %v186 = vxor.u32 %v180, 2147483648
    %v187 = vsel %vm185, %v179, %v186
    %vm188 = vcmp.eq.s32.totalorder %v183, 2
    %v189 = vxor.u32 %v179, 2147483648
    %v190 = vsel %vm188, %v189, %v180
    %v191 = vsel %vm184, %v187, %v190
    %v192 = vsel %vm181, nan, %v191
    %193 = vst [vmem:[#allocation7] sm:$0x3] %v192
    // Predicated region
    $region22: #{tpu_custom_call.1} parent=1 // pred_check
      _
    $region23: #{tpu_custom_call.1} parent=1 // pred_check_branch
      %195 = sbr.rel (0) target = $region25
    $region24: #{tpu_custom_call.1} parent=1 // pred_region
      %s197 = ssub.s32 32, 32
      %198 = vsyncadd [#allocation4], %s197
      %s200 = sshll.u32 [#allocation7], 4
      %s201 = int_to_ptr.vmem [resolvable:$true] %s200
      %203 = dma.vmem_to_hbm [thread:$0]  %s201, 32, %s3, [#allocation4]
    $region25: #{tpu_custom_call.1} parent=1 // pred_fallthru
      _
    // Predicated region
    $region26: #{tpu_custom_call.1} parent=1 // pred_check
      _
    $region27: #{tpu_custom_call.1} parent=1 // pred_check_branch
      %205 = sbr.rel (0) target = $region29
    $region28: #{tpu_custom_call.1} parent=1 // pred_region
      %206 = dma.done [#allocation4], 32
    $region29: #{tpu_custom_call.1} parent=1 // pred_fallthru
      _
    %207 = vsyncpa [#allocation3], 1
    %208 = vsyncpa [#allocation6], 1
    %209 = vsyncpa [#allocation4], 1

</llo_original>
